<compile_context>
chip_gen: v7x
topology: tpu7x:2x2x1
jax: 0.10.0
libtpu: 0.0.40
codegen_flags: <defaults>
</compile_context>

<pallas_src>
import functools

import jax
import jax.numpy as jnp
from jax.experimental import pallas as pl
from jax.experimental.pallas import tpu as pltpu


def _round_up(x, m):
    return (x + m - 1) // m * m


def _pick_images_per_block(n, hw):
    """Aim for >=512 output lanes per grid step, but keep >=2 grid steps."""
    target = max(1, 512 // max(hw, 1))
    for cand in range(min(n, target), 0, -1):
        if n % cand == 0 and (n // cand >= 2 or n == 1):
            return cand
    return 1


def _conv_bn_relu_kernel(x_ref, w_ref, sb_ref, mask_ref, o_ref, s_ref, *,
                         W, HW, Cin, Nb, base):
    # x_ref:    (Nb, Cin, HW)   f32   raw images, flattened spatial, no padding
    # w_ref:    (Cout, 9*Cin)   bf16  tap-major im2col weights
    # sb_ref:   (2, Cout, 1)    f32   folded BN [scale; bias]
    # mask_ref: (2, HW)         bf16  [zero col W-1 (kw=0) ; zero col 0 (kw=2)]
    # o_ref:    (Nb, Cout, HW)  f32
    # s_ref:    (9*Cin, FLAT2)  bf16  im2col scratch (9 shifted image copies)

    # Zero the scratch every step (cheap: a few vreg stores).  The un-stored
    # margins realise the top/bottom zero rows of the convolution padding, and
    # per-step re-init keeps the "parallel" grid megacore-safe (each core's
    # scratch starts uninitialised).
    s_ref[...] = jnp.zeros(s_ref.shape, s_ref.dtype)

    m_kw0 = mask_ref[pl.ds(0, 1), :]   # (1, HW): zeros image column W-1
    m_kw2 = mask_ref[pl.ds(1, 1), :]   # (1, HW): zeros image column 0
    scale = sb_ref[0]                  # (Cout, 1)
    bias = sb_ref[1]                   # (Cout, 1)

    for n in range(Nb):
        img = x_ref[n].astype(jnp.bfloat16)          # (Cin, HW) cast in-kernel
        # Edge-masked variants kill the horizontal wrap of the flat layout.
        img_by_kw = (img * m_kw0, img, img * m_kw2)

        # im2col: 9 statically shifted copies; afterwards s_ref[:, base:base+HW]
        # is exactly the (9*Cin, HW) RHS (zeros where the conv pad would be).
        for k in range(9):
            kh, kw = divmod(k, 3)
            dest = base + (1 - kh) * W - kw + 1      # static lane offset >= 0
            s_ref[pl.ds(k * Cin, Cin), pl.ds(dest, HW)] = img_by_kw[kw]

        rhs = s_ref[:, pl.ds(base, HW)]              # (9*Cin, HW) bf16, aligned
        acc = jnp.dot(w_ref[...], rhs,
                      preferred_element_type=jnp.float32)   # (Cout, HW) f32

        y = acc * scale + bias                       # folded eval-mode BN
        o_ref[n] = jnp.maximum(y, 0.0).astype(o_ref.dtype)  # ReLU


def conv_bn_relu_pallas(x_nchw, conv_w_oihw, gamma, beta, running_mean,
                        running_var, eps=1e-5):
    """x_nchw: (N, Cin, H, W) float32. Returns (N, Cout, H, W) float32."""
    N, Cin, H, W = x_nchw.shape
    Cout = conv_w_oihw.shape[0]
    HW = H * W

    # Lane-aligned read offset for the im2col RHS slice; scratch width covers
    # the furthest shifted copy.
    base = _round_up(W + 1, 128)
    FLAT2 = base + HW + W + 1

    Nb = _pick_images_per_block(N, HW)
    assert N % Nb == 0

    # --- input: free reshape only (no pad, no cast, no transpose in HBM)
    x_flat = x_nchw.reshape(N, Cin, HW)

    # --- weights: (Cout, Cin, 3, 3) -> tap-major (Cout, 9*Cin) bf16
    w_mat = jnp.transpose(conv_w_oihw, (0, 2, 3, 1)).reshape(
        Cout, 9 * Cin).astype(jnp.bfloat16)

    # --- folded eval-mode BN params merged into one small fp32 operand
    scale = gamma / jnp.sqrt(running_var + eps)
    bias = beta - running_mean * scale
    sb = jnp.stack([scale, bias]).astype(jnp.float32).reshape(2, Cout, 1)

    # --- horizontal-edge masks (image-column coordinates), tiny bf16 operand
    col = jnp.arange(HW, dtype=jnp.int32) % W
    masks = jnp.stack([(col != W - 1), (col != 0)]).astype(jnp.bfloat16)

    kernel = functools.partial(_conv_bn_relu_kernel,
                               W=W, HW=HW, Cin=Cin, Nb=Nb, base=base)

    out_flat = pl.pallas_call(
        kernel,
        out_shape=jax.ShapeDtypeStruct((N, Cout, HW), jnp.float32),
        grid_spec=pltpu.PrefetchScalarGridSpec(
            num_scalar_prefetch=0,
            grid=(N // Nb,),
            in_specs=[
                pl.BlockSpec((Nb, Cin, HW), lambda i: (i, 0, 0)),
                # grid-invariant operands (constant index maps)
                pl.BlockSpec((Cout, 9 * Cin), lambda i: (0, 0)),
                pl.BlockSpec((2, Cout, 1), lambda i: (0, 0, 0)),
                pl.BlockSpec((2, HW), lambda i: (0, 0)),
            ],
            out_specs=pl.BlockSpec((Nb, Cout, HW), lambda i: (i, 0, 0)),
            scratch_shapes=[pltpu.VMEM((9 * Cin, FLAT2), jnp.bfloat16)],
        ),
        compiler_params=pltpu.CompilerParams(
            dimension_semantics=("parallel",)),
    )(x_flat, w_mat, sb, masks)

    # --- output: free reshape back to NCHW (no slice, no wasted columns)
    return out_flat.reshape(N, Cout, H, W)


def _reference(x_nchw, conv_w_oihw, gamma, beta, running_mean, running_var,
               eps=1e-5):
    y = jax.lax.conv_general_dilated(
        x_nchw, conv_w_oihw, window_strides=(1, 1), padding=((1, 1), (1, 1)),
        dimension_numbers=("NCHW", "OIHW", "NCHW"))
    scale = (gamma / jnp.sqrt(running_var + eps)).reshape(1, -1, 1, 1)
    bias = (beta - running_mean * gamma /
            jnp.sqrt(running_var + eps)).reshape(1, -1, 1, 1)
    return jnp.maximum(y * scale + bias, 0.0)


if __name__ == "__main__":
    key = jax.random.PRNGKey(0)
    k1, k2, k3, k4, k5, k6 = jax.random.split(key, 6)

    N, Cin, Cout, H, W = 2, 4, 8, 16, 16

    x = jax.random.normal(k1, (N, Cin, H, W), dtype=jnp.float32)
    conv_w = jax.random.normal(k2, (Cout, Cin, 3, 3), dtype=jnp.float32) * 0.1
    gamma = 1.0 + 0.1 * jax.random.normal(k3, (Cout,), dtype=jnp.float32)
    beta = 0.1 * jax.random.normal(k4, (Cout,), dtype=jnp.float32)
    running_mean = 0.1 * jax.random.normal(k5, (Cout,), dtype=jnp.float32)
    running_var = jnp.abs(jax.random.normal(k6, (Cout,), dtype=jnp.float32)) + 0.5

    out = conv_bn_relu_pallas(x, conv_w, gamma, beta, running_mean, running_var)
    out = jax.block_until_ready(out)
    assert out.shape == (N, Cout, H, W)

    # Exact-math check: same bf16-quantized conv inputs, fp32 accumulation.
    xq = x.astype(jnp.bfloat16).astype(jnp.float32)
    wq = conv_w.astype(jnp.bfloat16).astype(jnp.float32)
    ref_q = _reference(xq, wq, gamma, beta, running_mean, running_var)
    assert jnp.allclose(out, ref_q, atol=1e-3, rtol=1e-3), \
        "mismatch vs bf16-input reference"

    # Loose check against the full-fp32 reference (bf16 MXU inputs by design).
    ref = _reference(x, conv_w, gamma, beta, running_mean, running_var)
    assert jnp.allclose(out, ref, atol=5e-2, rtol=5e-2), \
        "mismatch vs fp32 reference"

    print("KERNEL_OK")
</pallas_src>

<mosaic_0001>
module attributes {stable_mosaic.version = 11 : i64} {
  func.func @_conv_bn_relu_kernel(%arg0: i32, %arg1: memref<1x4x256xf32, #tpu.memory_space<vmem>>, %arg2: memref<8x36xbf16, #tpu.memory_space<vmem>>, %arg3: memref<2x8x1xf32, #tpu.memory_space<vmem>>, %arg4: memref<2x256xbf16, #tpu.memory_space<vmem>>, %arg5: memref<1x8x256xf32, #tpu.memory_space<vmem>>, %arg6: memref<36x401xbf16, #tpu.memory_space<vmem>>) attributes {dimension_semantics = [#tpu.dimension_semantics<parallel>], iteration_bounds = array<i64: 2>, scalar_prefetch = 0 : i64, scratch_operands = 1 : i64, tpu.core_type = #tpu.core_type<tc>, window_params = [{transform_indices = @transform_0, window_bounds = array<i64: 1, 4, 256>}, {pipeline_mode = #tpu.pipeline_mode<synchronous>, transform_indices = @transform_1, window_bounds = array<i64: 8, 36>}, {pipeline_mode = #tpu.pipeline_mode<synchronous>, transform_indices = @transform_2, window_bounds = array<i64: 2, 8, 1>}, {pipeline_mode = #tpu.pipeline_mode<synchronous>, transform_indices = @transform_3, window_bounds = array<i64: 2, 256>}, {transform_indices = @transform_4, window_bounds = array<i64: 1, 8, 256>}]} {
    %cst = arith.constant 0.000000e+00 : bf16
    %0 = vector.broadcast %cst : bf16 to vector<36x401xbf16>
    %c0 = arith.constant 0 : index
    %c0_0 = arith.constant 0 : index
    %1 = vector.load %arg6[%c0, %c0_0] : memref<36x401xbf16, #tpu.memory_space<vmem>>, vector<36x401xbf16>
    tpu.vector_store %arg6[%c0, %c0_0], %0 {strides = array<i32>} : memref<36x401xbf16, #tpu.memory_space<vmem>>, vector<36x401xbf16>,
    %c0_1 = arith.constant 0 : index
    %c0_2 = arith.constant 0 : index
    %2 = vector.load %arg4[%c0_1, %c0_2] : memref<2x256xbf16, #tpu.memory_space<vmem>>, vector<1x256xbf16>
    %c1 = arith.constant 1 : index
    %c0_3 = arith.constant 0 : index
    %3 = vector.load %arg4[%c1, %c0_3] : memref<2x256xbf16, #tpu.memory_space<vmem>>, vector<1x256xbf16>
    %c0_4 = arith.constant 0 : index
    %c0_5 = arith.constant 0 : index
    %c0_6 = arith.constant 0 : index
    %4 = vector.load %arg3[%c0_4, %c0_5, %c0_6] : memref<2x8x1xf32, #tpu.memory_space<vmem>>, vector<1x8x1xf32>
    %5 = vector.shape_cast %4 : vector<1x8x1xf32> to vector<8x1xf32>
    %c1_7 = arith.constant 1 : index
    %c0_8 = arith.constant 0 : index
    %c0_9 = arith.constant 0 : index
    %6 = vector.load %arg3[%c1_7, %c0_8, %c0_9] : memref<2x8x1xf32, #tpu.memory_space<vmem>>, vector<1x8x1xf32>
    %7 = vector.shape_cast %6 : vector<1x8x1xf32> to vector<8x1xf32>
    %c0_10 = arith.constant 0 : index
    %c0_11 = arith.constant 0 : index
    %c0_12 = arith.constant 0 : index
    %8 = vector.load %arg1[%c0_10, %c0_11, %c0_12] : memref<1x4x256xf32, #tpu.memory_space<vmem>>, vector<1x4x256xf32>
    %9 = vector.shape_cast %8 : vector<1x4x256xf32> to vector<4x256xf32>
    %10 = arith.truncf %9 : vector<4x256xf32> to vector<4x256xbf16>
    %11 = vector.broadcast %2 : vector<1x256xbf16> to vector<4x256xbf16>
    %12 = arith.mulf %10, %11 : vector<4x256xbf16>
    %13 = vector.broadcast %3 : vector<1x256xbf16> to vector<4x256xbf16>
    %14 = arith.mulf %10, %13 : vector<4x256xbf16>
    %c0_13 = arith.constant 0 : index
    %c145 = arith.constant 145 : index
    %15 = vector.load %arg6[%c0_13, %c145] : memref<36x401xbf16, #tpu.memory_space<vmem>>, vector<4x256xbf16>
    tpu.vector_store %arg6[%c0_13, %c145], %12 {strides = array<i32>} : memref<36x401xbf16, #tpu.memory_space<vmem>>, vector<4x256xbf16>,
    %c4 = arith.constant 4 : index
    %c144 = arith.constant 144 : index
    %16 = vector.load %arg6[%c4, %c144] : memref<36x401xbf16, #tpu.memory_space<vmem>>, vector<4x256xbf16>
    tpu.vector_store %arg6[%c4, %c144], %10 {strides = array<i32>} : memref<36x401xbf16, #tpu.memory_space<vmem>>, vector<4x256xbf16>,
    %c8 = arith.constant 8 : index
    %c143 = arith.constant 143 : index
    %17 = vector.load %arg6[%c8, %c143] : memref<36x401xbf16, #tpu.memory_space<vmem>>, vector<4x256xbf16>
    tpu.vector_store %arg6[%c8, %c143], %14 {strides = array<i32>} : memref<36x401xbf16, #tpu.memory_space<vmem>>, vector<4x256xbf16>,
    %c12 = arith.constant 12 : index
    %c129 = arith.constant 129 : index
    %18 = vector.load %arg6[%c12, %c129] : memref<36x401xbf16, #tpu.memory_space<vmem>>, vector<4x256xbf16>
    tpu.vector_store %arg6[%c12, %c129], %12 {strides = array<i32>} : memref<36x401xbf16, #tpu.memory_space<vmem>>, vector<4x256xbf16>,
    %c16 = arith.constant 16 : index
    %c128 = arith.constant 128 : index
    %19 = vector.load %arg6[%c16, %c128] : memref<36x401xbf16, #tpu.memory_space<vmem>>, vector<4x256xbf16>
    tpu.vector_store %arg6[%c16, %c128], %10 {strides = array<i32>} : memref<36x401xbf16, #tpu.memory_space<vmem>>, vector<4x256xbf16>,
    %c20 = arith.constant 20 : index
    %c127 = arith.constant 127 : index
    %20 = vector.load %arg6[%c20, %c127] : memref<36x401xbf16, #tpu.memory_space<vmem>>, vector<4x256xbf16>
    tpu.vector_store %arg6[%c20, %c127], %14 {strides = array<i32>} : memref<36x401xbf16, #tpu.memory_space<vmem>>, vector<4x256xbf16>,
    %c24 = arith.constant 24 : index
    %c113 = arith.constant 113 : index
    %21 = vector.load %arg6[%c24, %c113] : memref<36x401xbf16, #tpu.memory_space<vmem>>, vector<4x256xbf16>
    tpu.vector_store %arg6[%c24, %c113], %12 {strides = array<i32>} : memref<36x401xbf16, #tpu.memory_space<vmem>>, vector<4x256xbf16>,
    %c28 = arith.constant 28 : index
    %c112 = arith.constant 112 : index
    %22 = vector.load %arg6[%c28, %c112] : memref<36x401xbf16, #tpu.memory_space<vmem>>, vector<4x256xbf16>
    tpu.vector_store %arg6[%c28, %c112], %10 {strides = array<i32>} : memref<36x401xbf16, #tpu.memory_space<vmem>>, vector<4x256xbf16>,
    %c32 = arith.constant 32 : index
    %c111 = arith.constant 111 : index
    %23 = vector.load %arg6[%c32, %c111] : memref<36x401xbf16, #tpu.memory_space<vmem>>, vector<4x256xbf16>
    tpu.vector_store %arg6[%c32, %c111], %14 {strides = array<i32>} : memref<36x401xbf16, #tpu.memory_space<vmem>>, vector<4x256xbf16>,
    %c0_14 = arith.constant 0 : index
    %c128_15 = arith.constant 128 : index
    %24 = vector.load %arg6[%c0_14, %c128_15] : memref<36x401xbf16, #tpu.memory_space<vmem>>, vector<36x256xbf16>
    %c0_16 = arith.constant 0 : index
    %c0_17 = arith.constant 0 : index
    %25 = vector.load %arg2[%c0_16, %c0_17] : memref<8x36xbf16, #tpu.memory_space<vmem>>, vector<8x36xbf16>
    %cst_18 = arith.constant dense<0.000000e+00> : vector<8x256xf32>
    %26 = tpu.matmul %25, %24, %cst_18 {dimension_numbers = #tpu.dot_dimension_numbers<[1], [0], [0], [1], [0, 0, 1, 1], [], []>} : vector<8x36xbf16>, vector<36x256xbf16>, vector<8x256xf32> -> vector<8x256xf32>
    %27 = vector.broadcast %5 : vector<8x1xf32> to vector<8x256xf32>
    %28 = arith.mulf %26, %27 : vector<8x256xf32>
    %29 = vector.broadcast %7 : vector<8x1xf32> to vector<8x256xf32>
    %30 = arith.addf %28, %29 : vector<8x256xf32>
    %cst_19 = arith.constant 0.000000e+00 : f32
    %31 = vector.broadcast %cst_19 : f32 to vector<8x256xf32>
    %32 = arith.maximumf %30, %31 : vector<8x256xf32>
    %c0_20 = arith.constant 0 : index
    %c0_21 = arith.constant 0 : index
    %c0_22 = arith.constant 0 : index
    %33 = vector.load %arg5[%c0_20, %c0_21, %c0_22] : memref<1x8x256xf32, #tpu.memory_space<vmem>>, vector<1x8x256xf32>
    %34 = vector.shape_cast %33 : vector<1x8x256xf32> to vector<8x256xf32>
    %35 = vector.shape_cast %32 : vector<8x256xf32> to vector<1x8x256xf32>
    tpu.vector_store %arg5[%c0_20, %c0_21, %c0_22], %35 {strides = array<i32>} : memref<1x8x256xf32, #tpu.memory_space<vmem>>, vector<1x8x256xf32>,
    return
  }
  func.func @transform_0(%arg0: i32) -> (i32, i32, i32) {
    %c0_i32 = arith.constant 0 : i32
    %c0_i32_0 = arith.constant 0 : i32
    %c0_i32_1 = arith.constant 0 : i32
    return %arg0, %c0_i32, %c0_i32_0 : i32, i32, i32
  }
  func.func @transform_1(%arg0: i32) -> (i32, i32) {
    %c0_i32 = arith.constant 0 : i32
    %c0_i32_0 = arith.constant 0 : i32
    %c0_i32_1 = arith.constant 0 : i32
    return %c0_i32, %c0_i32_0 : i32, i32
  }
  func.func @transform_2(%arg0: i32) -> (i32, i32, i32) {
    %c0_i32 = arith.constant 0 : i32
    %c0_i32_0 = arith.constant 0 : i32
    %c0_i32_1 = arith.constant 0 : i32
    %c0_i32_2 = arith.constant 0 : i32
    return %c0_i32, %c0_i32_0, %c0_i32_1 : i32, i32, i32
  }
  func.func @transform_3(%arg0: i32) -> (i32, i32) {
    %c0_i32 = arith.constant 0 : i32
    %c0_i32_0 = arith.constant 0 : i32
    %c0_i32_1 = arith.constant 0 : i32
    return %c0_i32, %c0_i32_0 : i32, i32
  }
  func.func @transform_4(%arg0: i32) -> (i32, i32, i32) {
    %c0_i32 = arith.constant 0 : i32
    %c0_i32_0 = arith.constant 0 : i32
    %c0_i32_1 = arith.constant 0 : i32
    return %arg0, %c0_i32, %c0_i32_0 : i32, i32, i32
  }
}

</mosaic_0001>

<llo_original>
// kernel: tpu_custom_call.1
$region0: #{tpu_custom_call.1}
  #allocation0 [shape = 'u32[]', space=smem, size = 0x4, offset = 0x4, fixed_abs, tag = 'smem constant byte address 0x4 - core index']
  #allocation1 [shape = 'u32[144,128]{1,0:T(1,128)}', space=vmem, size = 0x12000, scoped, tag = 'internal scratch']
  #allocation2 [shape = 'bf16[36,401]{1,0:T(8,128)(2,1)}', space=vmem, size = 0xa000, scoped, tag = 'scratch operand']
  %s0 = inlined_call_operand.vmem [shape: f32[2,4,256], index: 0, kind: input, shape index: {}]
  %s1 = inlined_call_operand.vmem [shape: bf16[8,36], index: 1, kind: input, shape index: {}]
  %s2 = inlined_call_operand.vmem [shape: f32[2,8,1], index: 2, kind: input, shape index: {}]
  %s3 = inlined_call_operand.vmem [shape: bf16[2,256], index: 3, kind: input, shape index: {}]
  %s4 = inlined_call_operand.hbm [shape: f32[2,8,256], index: 4, kind: output, shape index: {}]
  %s5 = sld [smem:[#allocation0]]
  $region49: #{tpu_custom_call.1} parent=0
    _
  %s7 = ssub.s32 1, %s5
  %s8 = scalar_select 0, %s7, %s5
  $region1: #{tpu_custom_call.1} parent=0
    #allocation3 [shape = 'u8[16384]{0}', space=vmem, size = 0x4000, scoped, tag = 'output window, operand 0']
    #allocation4 [shape = 's32[2]{0}', space=sflag, size = 0x8, scoped, tag = 'scoped memory for tpu_custom_call.1']
    %9 = vsyncpa [#allocation4], 0
    %s10 = scalar_lea.sflag [#allocation4], 1
    %11 = vsyncpa %s10, 0
    loop: start=0, step=1, limit=4
    $region2: #{tpu_custom_call.1} parent=1 // loop_pre_header
      _
    $region3: #{tpu_custom_call.1} parent=1 // loop_header
      %s13 = sphi 0, %s17
      %p14 = scmp.ge.s32.totalorder %s13, 4
      %s23 = sphi 0, %s25
      %s26 = sphi 0, %s23
      %s27 = sphi 0, %s26
      %s43 = sphi 0, %s27
      %s47 = sphi 0, %s47
      %s49 = sphi 0, %s47
      %s50 = sphi 0, %s49
      %s64 = sphi 0, %s50
      %s68 = sphi 0, %s68
      %s70 = sphi 0, %s68
      %s71 = sphi 0, %s70
      %s85 = sphi 0, %s71
      %s89 = sphi 0, %s89
      %s91 = sphi 0, %s89
      %s92 = sphi 0, %s91
      %s106 = sphi 0, %s92
      %s112 = sphi 0, %s114
      %s115 = sphi 0, %s112
      %s116 = sphi 0, %s115
      %s132 = sphi 0, %s116
    $region4: #{tpu_custom_call.1} parent=1 // loop_header_branch
      %16 = sbr.rel (%p14) target = $region8
    $region5: #{tpu_custom_call.1} parent=1 // loop_body
      %s18 = ssub.s32 %s13, 1
      %s19 = ssub.s32 %s13, 2
      %s20 = sadd.s32 %s13, 1
      %s21 = ssub.s32 %s13, %s20
      %p22 = scmp.eq.s32.totalorder %s21, 0
      %s24 = sadd.s32 %s23, 1
      %s25 = scalar_select %p22, %s23, %s24
      %p28 = pneg %p22
      %p29 = scmp.eq.s32.totalorder %s13, 1
      %p30 = por %p28, %p29
      %p31 = scmp.ne.s32.totalorder %s23, %s26
      %p32 = scmp.eq.s32.totalorder %s13, 0
      %p33 = por %p31, %p32
      %p34 = scmp.ne.s32.totalorder %s23, %s26
      %p35 = scmp.eq.s32.totalorder %s18, 1
      %p36 = por %p34, %p35
      %p37 = scmp.ne.s32.totalorder %s26, %s27
      %p38 = scmp.eq.s32.totalorder %s18, 0
      %p39 = por %p37, %p38
      %p40 = scmp.ne.s32.totalorder %s26, %s27
      %p41 = scmp.eq.s32.totalorder %s19, 1
      %p42 = por %p40, %p41
      %p44 = scmp.ne.s32.totalorder %s27, %s43
      %p45 = scmp.eq.s32.totalorder %s19, 0
      %p46 = por %p44, %p45
      %s48 = sadd.s32 %s47, 1
      %p51 = scmp.eq.s32.totalorder %s13, 1
      %p52 = scmp.ne.s32.totalorder %s47, %s49
      %p53 = scmp.eq.s32.totalorder %s13, 0
      %p54 = por %p52, %p53
      %p55 = scmp.ne.s32.totalorder %s47, %s49
      %p56 = scmp.eq.s32.totalorder %s18, 1
      %p57 = por %p55, %p56
      %p58 = scmp.ne.s32.totalorder %s49, %s50
      %p59 = scmp.eq.s32.totalorder %s18, 0
      %p60 = por %p58, %p59
      %p61 = scmp.ne.s32.totalorder %s49, %s50
      %p62 = scmp.eq.s32.totalorder %s19, 1
      %p63 = por %p61, %p62
      %p65 = scmp.ne.s32.totalorder %s50, %s64
      %p66 = scmp.eq.s32.totalorder %s19, 0
      %p67 = por %p65, %p66
      %s69 = sadd.s32 %s68, 1
      %p72 = scmp.eq.s32.totalorder %s13, 1
      %p73 = scmp.ne.s32.totalorder %s68, %s70
      %p74 = scmp.eq.s32.totalorder %s13, 0
      %p75 = por %p73, %p74
      %p76 = scmp.ne.s32.totalorder %s68, %s70
      %p77 = scmp.eq.s32.totalorder %s18, 1
      %p78 = por %p76, %p77
      %p79 = scmp.ne.s32.totalorder %s70, %s71
      %p80 = scmp.eq.s32.totalorder %s18, 0
      %p81 = por %p79, %p80
      %p82 = scmp.ne.s32.totalorder %s70, %s71
      %p83 = scmp.eq.s32.totalorder %s19, 1
      %p84 = por %p82, %p83
      %p86 = scmp.ne.s32.totalorder %s71, %s85
      %p87 = scmp.eq.s32.totalorder %s19, 0
      %p88 = por %p86, %p87
      %s90 = sadd.s32 %s89, 1
      %p93 = scmp.eq.s32.totalorder %s13, 1
      %p94 = scmp.ne.s32.totalorder %s89, %s91
      %p95 = scmp.eq.s32.totalorder %s13, 0
      %p96 = por %p94, %p95
      %p97 = scmp.ne.s32.totalorder %s89, %s91
      %p98 = scmp.eq.s32.totalorder %s18, 1
      %p99 = por %p97, %p98
      %p100 = scmp.ne.s32.totalorder %s91, %s92
      %p101 = scmp.eq.s32.totalorder %s18, 0
      %p102 = por %p100, %p101
      %p103 = scmp.ne.s32.totalorder %s91, %s92
      %p104 = scmp.eq.s32.totalorder %s19, 1
      %p105 = por %p103, %p104
      %p107 = scmp.ne.s32.totalorder %s92, %s106
      %p108 = scmp.eq.s32.totalorder %s19, 0
      %p109 = por %p107, %p108
      %s110 = ssub.s32 %s13, %s20
      %p111 = scmp.eq.s32.totalorder %s110, 0
      %s113 = sadd.s32 %s112, 1
      %s114 = scalar_select %p111, %s112, %s113
      %p117 = pneg %p111
      %p118 = scmp.eq.s32.totalorder %s13, 1
      %p119 = por %p117, %p118
      %p120 = scmp.ne.s32.totalorder %s112, %s115
      %p121 = scmp.eq.s32.totalorder %s13, 0
      %p122 = por %p120, %p121
      %p123 = scmp.ne.s32.totalorder %s112, %s115
      %p124 = scmp.eq.s32.totalorder %s18, 1
      %p125 = por %p123, %p124
      %p126 = scmp.ne.s32.totalorder %s115, %s116
      %p127 = scmp.eq.s32.totalorder %s18, 0
      %p128 = por %p126, %p127
      %p129 = scmp.ne.s32.totalorder %s115, %s116
      %p130 = scmp.eq.s32.totalorder %s19, 1
      %p131 = por %p129, %p130
      %p133 = scmp.ne.s32.totalorder %s116, %s132
      %p134 = scmp.eq.s32.totalorder %s19, 0
      %p135 = por %p133, %p134
      %p136 = scmp.le.s32.totalorder 1, %s13
      %p137 = scmp.lt.s32.totalorder %s13, 3
      %p138 = pnand %p136, %p137
      %p139 = pneg %p138
      // Predicated region
      $region9: #{tpu_custom_call.1} parent=5 // pred_check
        _
      $region10: #{tpu_custom_call.1} parent=5 // pred_check_branch
        %141 = sbr.rel (%p138) target = $region12
      $region11: #{tpu_custom_call.1} parent=5 // pred_region
        %s142 = ssub.s32 %s13, 1
        // Predicated region
        $region13: #{tpu_custom_call.1} parent=11 // pred_check
          %p143 = pneg %p60
        $region14: #{tpu_custom_call.1} parent=11 // pred_check_branch
          %145 = sbr.rel (%p143) target = $region16
        $region15: #{tpu_custom_call.1} parent=11 // pred_region
          _
        $region16: #{tpu_custom_call.1} parent=11 // pred_fallthru
          _
        // Predicated region
        $region17: #{tpu_custom_call.1} parent=11 // pred_check
          %p146 = pneg %p81
        $region18: #{tpu_custom_call.1} parent=11 // pred_check_branch
          %148 = sbr.rel (%p146) target = $region20
        $region19: #{tpu_custom_call.1} parent=11 // pred_region
          _
        $region20: #{tpu_custom_call.1} parent=11 // pred_fallthru
          _
        // Predicated region
        $region21: #{tpu_custom_call.1} parent=11 // pred_check
          %p149 = pneg %p102
        $region22: #{tpu_custom_call.1} parent=11 // pred_check_branch
          %151 = sbr.rel (%p149) target = $region24
        $region23: #{tpu_custom_call.1} parent=11 // pred_region
          _
        $region24: #{tpu_custom_call.1} parent=11 // pred_fallthru
          _
      $region12: #{tpu_custom_call.1} parent=5 // pred_fallthru
        _
      %p152 = scmp.lt.s32.totalorder %s13, 2
      // Predicated region
      $region25: #{tpu_custom_call.1} parent=5 // pred_check
        %p153 = pneg %p152
      $region26: #{tpu_custom_call.1} parent=5 // pred_check_branch
        %155 = sbr.rel (%p153) target = $region28
      $region27: #{tpu_custom_call.1} parent=5 // pred_region
        // Predicated region
        $region29: #{tpu_custom_call.1} parent=27 // pred_check
          %p156 = pneg %p33
        $region30: #{tpu_custom_call.1} parent=27 // pred_check_branch
          %158 = sbr.rel (%p156) target = $region32
        $region31: #{tpu_custom_call.1} parent=27 // pred_region
          %p159 = scmp.lt.s32.totalorder %s13, 1
          %s160 = scalar_select %p159, %s13, 1
          %s161 = smul.addr %s160, 2
          %s162 = smul.addr %s161, 4
          %s163 = scalar_lea.vmem %s0, %s162
        $region32: #{tpu_custom_call.1} parent=27 // pred_fallthru
          _
      $region28: #{tpu_custom_call.1} parent=5 // pred_fallthru
        _
      %p164 = scmp.le.s32.totalorder 1, %s13
      %p165 = scmp.lt.s32.totalorder %s13, 3
      %p166 = pnand %p164, %p165
      %p167 = pneg %p166
      // Predicated region
      $region33: #{tpu_custom_call.1} parent=5 // pred_check
        _
      $region34: #{tpu_custom_call.1} parent=5 // pred_check_branch
        %169 = sbr.rel (%p166) target = $region36
      $region35: #{tpu_custom_call.1} parent=5 // pred_region
        %s170 = ssub.s32 %s13, 1
        %p171 = scmp.lt.s32.totalorder %s18, 1
        %s172 = scalar_select %p171, %s18, 1
        %s173 = smul.addr %s172, 2
        %s174 = smul.addr %s173, 4
        %s175 = scalar_lea.vmem %s0, %s174
        %p176 = pneg %p39
        %p177 = pneg %p36
        %p178 = pneg %p60
        %p179 = pneg %p57
        %p180 = pneg %p81
        %p181 = pneg %p78
        %p182 = pneg %p102
        %p183 = pneg %p99
        %p184 = pneg %p128
        %p185 = pneg %p125
        %s186 = sand.u32 %s115, 1
        %s187 = scalar_lea.sflag [#allocation4], %s186
        %s188 = sand.u32 %s115, 1
        %s189 = smul.addr %s188, 16
        %s190 = scalar_lea.vmem [#allocation3], %s189
        %p191 = scmp.lt.s32.totalorder %s18, 1
        %s192 = scalar_select %p191, %s18, 1
        %s193 = smul.addr %s192, 2
        %s194 = smul.addr %s193, 4
        %s195 = scalar_lea.vmem %s0, %s194
        %197 = vst [vmem:[#allocation2] sm:$0xff] 0
        %vm198 = vcmask 1043456
        %vm199 = vcmask 138244
        %vm200 = vmor %vm199, %vm198
        %201 = vst.msk [vmem:[#allocation2 + $0x8] sm:$0xff] %vm200, 0
        %202 = vst [vmem:[#allocation2 + $0x10] sm:$0xff] 0
        %203 = vst.msk [vmem:[#allocation2 + $0x18] sm:$0xff] %vm200, 0
        %204 = vst [vmem:[#allocation2 + $0x20] sm:$0xff] 0
        %205 = vst.msk [vmem:[#allocation2 + $0x28] sm:$0xff] %vm200, 0
        %206 = vst [vmem:[#allocation2 + $0x30] sm:$0xff] 0
        %207 = vst.msk [vmem:[#allocation2 + $0x38] sm:$0xff] %vm200, 0
        %208 = vst [vmem:[#allocation2 + $0x40] sm:$0x33] 0
        %vm209 = vcmask 1041408
        %vm210 = vcmask 136196
        %vm211 = vmor %vm210, %vm209
        %212 = vst.msk [vmem:[#allocation2 + $0x48] sm:$0x33] %vm211, 0
        %v213 = vld [vmem:[%s3] sm:$0x3]
        %v214 = vld [vmem:[%s2] sm:$0xff]
        %s215 = scalar_lea.vmem %s2, 8
        %v216 = vld [vmem:[%s215] sm:$0xff]
        %v217 = vld [vmem:[%s195] sm:$0xff]
        %v219 = vcombine.high %v217, %v217
        %v221 = vpack.c.bf16 %v217, %v217
        %v222 = vpack.c.bf16 %v219, %v219
        %v225 = vunpack.c.l.s4 1966171168
        %v226 = vunpack.c.0.s8 %v225
        %v227 = vlaneseq
        %v228 = vshrl.u32 %v227, 7
        %v229 = vsub.s32 %v226, %v228
        %v230 = vrot.slane %v213, %v229
        %v231 = vcombine.high %v230, %v230
        %v233 = vunpack.c.l.s4 1966171168
        %v234 = vunpack.c.0.s8 %v233
        %v235 = vlaneseq
        %v236 = vshrl.u32 %v235, 7
        %v237 = vsub.s32 %v234, %v236
        %v238 = vrot.slane %v230, %v237
        %v240 = vunpack.c.l.s4 1966171168
        %v241 = vunpack.c.0.s8 %v240
        %v242 = vlaneseq
        %v243 = vshrl.u32 %v242, 7
        %v244 = vsub.s32 %v241, %v243
        %v245 = vrot.slane %v231, %v244
        %v247 = vpack.i.b16 %v238, %v238
        %v249 = vlaneseq
        %v250 = vshrl.u32 %v249, 7
        %v251 = vsub.s32 0, %v250
        %v252 = vrot.slane %v247, %v251
        %v254 = vpack.i.b16 %v245, %v245
        %v256 = vlaneseq
        %v257 = vshrl.u32 %v256, 7
        %v258 = vsub.s32 0, %v257
        %v259 = vrot.slane %v254, %v258
        %v260 = vmul.bf16 %v221, %v252
        %v261 = vmul.bf16 %v222, %v259
        %v262 = vshrl.u32 %v238, 16
        %v263 = vpack.i.b16 %v262, %v262
        %v265 = vlaneseq
        %v266 = vshrl.u32 %v265, 7
        %v267 = vsub.s32 0, %v266
        %v268 = vrot.slane %v263, %v267
        %v269 = vshrl.u32 %v245, 16
        %v270 = vpack.i.b16 %v269, %v269
        %v272 = vlaneseq
        %v273 = vshrl.u32 %v272, 7
        %v274 = vsub.s32 0, %v273
        %v275 = vrot.slane %v270, %v274
        %v276 = vmul.bf16 %v221, %v268
        %v277 = vmul.bf16 %v222, %v275
        %v280 = vunpack.c.l.b16 %v260
        %v281 = vunpack.c.l.b16 %v261
        %v282 = vpack.c.b16 %v281, %v280
        %283 = vrot.lane.b32.xlu0 %v282, 17
        %v284 = vpop.permute.xlu0 %283
        %v285 = vrot.slane %v284, 4
        %vm286 = vcmask 138240
        %v287 = vsel %vm286, %v285, %v284
        %vm290 = vcmask 1041544
        %vm291 = vcmask 1045508
        %vm292 = vmor %vm291, %vm290
        %293 = vst.msk [vmem:[#allocation2 + $0x4] sm:$0x33] %vm292, %v287
        %vm294 = vcmask 132096
        %295 = vst.msk [vmem:[#allocation2 + $0xc] sm:$0x3] %vm294, %v285
        %v298 = vunpack.c.l.b16 %v221
        %v299 = vunpack.c.l.b16 %v222
        %v300 = vpack.c.b16 %v299, %v298
        %v301 = vrot.slane %v300, 6
        %302 = vrot.lane.b32.xlu0 %v301, 16
        %v303 = vpop.permute.xlu0 %302
        %v304 = vrot.slane %v303, 4
        %vm305 = vcmask 130048
        %v306 = vsel %vm305, %v304, %v303
        %vm309 = vcmask 1043586
        %vm310 = vcmask 1047558
        %vm311 = vmor %vm310, %vm309
        %312 = vst.msk [vmem:[#allocation2 + $0x4] sm:$0xcc] %vm311, %v306
        %vm313 = vcmask 125954
        %314 = vst.msk [vmem:[#allocation2 + $0xc] sm:$0xc] %vm313, %v304
        %v317 = vunpack.c.l.b16 %v276
        %v318 = vunpack.c.l.b16 %v277
        %v319 = vpack.c.b16 %v318, %v317
        %320 = vrot.lane.b32.xlu0 %v319, 15
        %v321 = vpop.permute.xlu0 %320
        %v322 = vrot.slane %v321, 4
        %vm323 = vcmask 121856
        %v324 = vsel %vm323, %v322, %v321
        %vm327 = vcmask 1041528
        %vm328 = vmor %vm291, %vm327
        %329 = vst.msk [vmem:[#allocation2 + $0x14] sm:$0x33] %vm328, %v324
        %vm330 = vcmask 115712
        %331 = vst.msk [vmem:[#allocation2 + $0x1c] sm:$0x3] %vm330, %v322
        %v332 = vrot.slane %v282, 6
        %333 = vrot.lane.b32.xlu0 %v332, 1
        %v334 = vpop.permute.xlu0 %333
        %v335 = vrot.slane %v334, 4
        %vm336 = vcmask 7168
        %v337 = vsel %vm336, %v335, %v334
        %vm340 = vcmask 1043466
        %vm341 = vmor %vm310, %vm340
        %342 = vst.msk [vmem:[#allocation2 + $0x14] sm:$0xcc] %vm341, %v337
        %vm343 = vcmask 3074
        %344 = vst.msk [vmem:[#allocation2 + $0x1c] sm:$0xc] %vm343, %v335
        %346 = vst [vmem:[#allocation2 + $0x24] sm:$0x33] %v300
        %v347 = vrot.slane %v319, 6
        %348 = vrot.lane.b32.xlu0 %v347, 127
        %v349 = vpop.permute.xlu0 %348
        %v350 = vrot.slane %v349, 4
        %vm351 = vcmask 1039360
        %v352 = vsel %vm351, %v350, %v349
        %vm355 = vcmask 1044474
        %vm356 = vmor %vm310, %vm355
        %357 = vst.msk [vmem:[#allocation2 + $0x20] sm:$0xcc] %vm356, %v352
        %vm358 = vcmask 1035266
        %359 = vst.msk [vmem:[#allocation2 + $0x28] sm:$0xc] %vm358, %v350
        %360 = vrot.lane.b32.xlu0 %v282, 113
        %v361 = vpop.permute.xlu0 %360
        %v362 = vrot.slane %v361, 4
        %vm363 = vcmask 924672
        %v364 = vsel %vm363, %v362, %v361
        %vm367 = vcmask 1042312
        %vm368 = vmor %vm291, %vm367
        %369 = vst.msk [vmem:[#allocation2 + $0x30] sm:$0x33] %vm368, %v364
        %vm370 = vcmask 918528
        %371 = vst.msk [vmem:[#allocation2 + $0x38] sm:$0x3] %vm370, %v362
        %372 = vrot.lane.b32.xlu0 %v301, 112
        %v373 = vpop.permute.xlu0 %372
        %v374 = vrot.slane %v373, 4
        %vm375 = vcmask 916480
        %v376 = vsel %vm375, %v374, %v373
        %vm379 = vcmask 1044354
        %vm380 = vmor %vm310, %vm379
        %381 = vst.msk [vmem:[#allocation2 + $0x30] sm:$0xcc] %vm380, %v376
        %vm382 = vcmask 912386
        %383 = vst.msk [vmem:[#allocation2 + $0x38] sm:$0xc] %vm382, %v374
        %384 = vrot.lane.b32.xlu0 %v319, 111
        %v385 = vpop.permute.xlu0 %384
        %v386 = vrot.slane %v385, 4
        %vm387 = vcmask 908288
        %v388 = vsel %vm387, %v386, %v385
        %vm391 = vcmask 1042296
        %vm392 = vmor %vm291, %vm391
        %393 = vst.msk [vmem:[#allocation2 + $0x40] sm:$0x33] %vm392, %v388
        %vm394 = vcmask 902144
        %395 = vst.msk [vmem:[#allocation2 + $0x48] sm:$0x3] %vm394, %v386
        %v396 = vld [vmem:[#allocation2 + $0x4] sm:$0xff]
        %v397 = vld [vmem:[#allocation2 + $0x14] sm:$0xff]
        %v398 = vld [vmem:[#allocation2 + $0x24] sm:$0xff]
        %v399 = vld [vmem:[#allocation2 + $0x34] sm:$0xff]
        %v400 = vld [vmem:[#allocation2 + $0x44] sm:$0x33]
        %v401 = vld [vmem:[%s1] sm:$0xf]
        %v407 = vunpack.c.l.b16 %v396
        %v408 = vunpack.c.h.b16 %v396
        %v409 = vunpack.c.l.b16 %v397
        %v410 = vunpack.c.h.b16 %v397
        %v411 = vunpack.c.l.b16 %v398
        %v412 = vunpack.c.h.b16 %v398
        %v413 = vunpack.c.l.b16 %v399
        %v414 = vunpack.c.h.b16 %v399
        %v415 = vunpack.c.l.b16 %v400
        %v416 = vunpack.c.h.b16 %v400
        %v417 = vpack.c.b16 %v409, %v407
        %v418 = vpack.c.b16 %v410, %v408
        %v419 = vpack.c.b16 %v413, %v411
        %v420 = vpack.c.b16 %v414, %v412
        %v421 = vpack.c.b16 %v415, %v415
        %v422 = vpack.c.b16 %v416, %v416
        %vm427 = vcmask 293888
        %v429 = vsel %vm427, %v401, 0
        %v432 = vsel %vm209, %v421, 0
        %v435 = vsel %vm209, %v422, 0
        %437 = vmatprep.subr.bf16.mxu0 %v418
        %438 = vmatpush1.bf16.msra.mxu0 %v417
        %439 = vmatprep.subr.bf16.mxu0 %v420
        %440 = vmatpush1.bf16.msra.mxu0 %v419
        %441 = vmatprep.subr.bf16.mxu0 %v435
        %442 = vmatpush1.bf16.msra.mxu0 %v432
        %443 = vmatprep.subr.bf16.mxu0 0
        %444 = vmatpush1.bf16.msra.mxu0 0
        %445 = vmatprep.subr.bf16.mxu0 0
        %446 = vmatpush1.bf16.msra.mxu0 0
        %447 = vmatprep.subr.bf16.mxu0 0
        %448 = vmatpush1.bf16.msra.mxu0 0
        %449 = vmatprep.subr.bf16.mxu0 0
        %450 = vmatpush1.bf16.msra.mxu0 0
        %451 = vmatprep.subr.bf16.mxu0 0
        %452 = vmatpush1.bf16.msra.mxu0 0
        %453 = vmatprep.subr.bf16.mxu0 0
        %454 = vmatpush1.bf16.msra.mxu0 0
        %455 = vmatprep.subr.bf16.mxu0 0
        %456 = vmatpush1.bf16.msra.mxu0 0
        %457 = vmatprep.subr.bf16.mxu0 0
        %458 = vmatpush1.bf16.msra.mxu0 0
        %459 = vmatprep.subr.bf16.mxu0 0
        %460 = vmatpush1.bf16.msra.mxu0 0
        %461 = vmatprep.subr.bf16.mxu0 0
        %462 = vmatpush1.bf16.msra.mxu0 0
        %463 = vmatprep.subr.bf16.mxu0 0
        %464 = vmatpush1.bf16.msra.mxu0 0
        %465 = vmatprep.subr.bf16.mxu0 0
        %466 = vmatpush1.bf16.msra.mxu0 0
        %467 = vmatprep.subr.bf16.mxu0 0
        %468 = vmatpush1.bf16.msra.mxu0 0
        %469 = vmatprep.mubr.bf16.mxu0 0
        %470 = vmatmul.mubr.bf16.gmra.mrb[0].mxu0 %v429
        %v471 = vpop.f32.mrb[0].mxu0
        %v472 = vadd.f32 0.0, %v471
        %v473 = vpop.f32.mrb[0].mxu0
        %v474 = vadd.f32 0.0, %v473
        %v475 = vpop.f32.mrb[0].mxu0
        %v476 = vpop.f32.mrb[0].mxu0
        %477 = vdwg.mxu0
        %479 = vset.pattern.permute.xlu0 0
        %480 = vperm.xlu0 %479, %v214
        %v481 = vpop.permute.xlu0 %480
        %v483 = vmul.f32 %v472, %v481
        %v484 = vmul.f32 %v474, %v481
        %486 = vset.pattern.permute.xlu0 0
        %487 = vperm.xlu0 %486, %v216
        %v488 = vpop.permute.xlu0 %487
        %v490 = vadd.f32 %v483, %v488
        %v491 = vadd.f32 %v484, %v488
        %v492 = vmax.f32 %v490, 0.0
        %v493 = vmax.f32 %v491, 0.0
        %494 = vst [vmem:[%s190] sm:$0xff] %v492
        %495 = vst [vmem:[%s190 + $0x8] sm:$0xff] %v493
        %s496 = sand.u32 %s115, 1
        %s497 = scalar_lea.sflag [#allocation4], %s496
        %s498 = sand.u32 %s115, 1
        %s499 = smul.addr %s498, 16
        %s500 = scalar_lea.vmem [#allocation3], %s499
        // Predicated region
        $region37: #{tpu_custom_call.1} parent=35 // pred_check
          %p501 = pneg %p125
        $region38: #{tpu_custom_call.1} parent=35 // pred_check_branch
          %503 = sbr.rel (%p501) target = $region40
        $region39: #{tpu_custom_call.1} parent=35 // pred_region
          %s505 = ssub.s32 256, 256
          %506 = vsyncadd %s497, %s505
          %s507 = smul.addr %s18, 2
          %s508 = smul.addr %s507, 128
          %s509 = scalar_lea.hbm %s4, %s508
          %s511 = sshll.u32 %s500, 4
          %s512 = int_to_ptr.vmem [resolvable:$true] %s511
          %514 = dma.vmem_to_hbm [thread:$0]  %s512, 256, %s509, %s497
        $region40: #{tpu_custom_call.1} parent=35 // pred_fallthru
          _
      $region36: #{tpu_custom_call.1} parent=5 // pred_fallthru
        _
      %p515 = scmp.le.s32.totalorder 2, %s13
      // Predicated region
      $region41: #{tpu_custom_call.1} parent=5 // pred_check
        %p516 = pneg %p515
      $region42: #{tpu_custom_call.1} parent=5 // pred_check_branch
        %518 = sbr.rel (%p516) target = $region44
      $region43: #{tpu_custom_call.1} parent=5 // pred_region
        %s519 = ssub.s32 %s13, 2
        // Predicated region
        $region45: #{tpu_custom_call.1} parent=43 // pred_check
          %p520 = pneg %p131
        $region46: #{tpu_custom_call.1} parent=43 // pred_check_branch
          %522 = sbr.rel (%p520) target = $region48
        $region47: #{tpu_custom_call.1} parent=43 // pred_region
          %s523 = sand.u32 %s116, 1
          %s524 = scalar_lea.sflag [#allocation4], %s523
          %s525 = sand.u32 %s116, 1
          %s526 = smul.addr %s525, 16
          %s527 = scalar_lea.vmem [#allocation3], %s526
          %528 = dma.done %s524, 256
        $region48: #{tpu_custom_call.1} parent=43 // pred_fallthru
          _
      $region44: #{tpu_custom_call.1} parent=5 // pred_fallthru
        _
    $region6: #{tpu_custom_call.1} parent=1 // loop_footer
      %s17 = sadd.s32 1, %s13
    $region7: #{tpu_custom_call.1} parent=1 // loop_footer_branch
      %12 = sbr.rel target = $region3
    $region8: #{tpu_custom_call.1} parent=1 // loop_exit
      _
    %529 = vsyncpa [#allocation4], 1
    %s530 = scalar_lea.sflag [#allocation4], 1
    %531 = vsyncpa %s530, 1

</llo_original>
